<compile_context>
chip_gen: v7x
topology: tpu7x:2x2x1
jax: 0.10.0
libtpu: 0.0.40
codegen_flags: <defaults>
</compile_context>

<pallas_src>
import functools
import math

import jax
import jax.numpy as jnp
from jax.experimental import pallas as pl
from jax.experimental.pallas import tpu as pltpu


_NT_DIMS = (((1,), (1,)), ((), ()))     # contract both matmul operands on their minor dim


# ----------------------------------------------------------------------------
# Hardware-aware sizing helpers
# ----------------------------------------------------------------------------

@functools.lru_cache(maxsize=1)
def _vmem_capacity_bytes():
    """Physical VMEM of the attached TPU (64 MiB on v7x, 128 MiB on v5e/v6e)."""
    try:
        return int(pltpu.get_tpu_info().vmem_capacity_bytes)
    except Exception:                         # conservative (v7x-sized) default
        return 64 * 2 ** 20


def _mosaic_params(grid_rank, need_bytes):
    """All grid axes are 'parallel'; VMEM clamp derived from the actual block bytes
    and the chip's physical VMEM (<= 50%), never below what the blocks need."""
    cap = _vmem_capacity_bytes()
    limit = int(min(cap // 2, max(8 * 2 ** 20, 4 * need_bytes)))
    limit = max(limit, int(1.5 * need_bytes) + (1 << 20))
    return pltpu.CompilerParams(
        dimension_semantics=("parallel",) * grid_rank,
        vmem_limit_bytes=limit)


def _pick_conv_m_tile(m, k, cout):
    """Largest M-tile (multiple of 128) fitting the VMEM budget.  Once M >= 256 the
    tile is capped at M//2 (rounded to 128) so the grid has >= 2 steps and the
    'parallel' axis feeds both v7x TensorCores; v5e/v6e (128 MiB VMEM, 1 TC) simply
    get the largest tile the budget allows."""
    if m < 128:
        return m                              # single full-dim tile (blocks == array)
    budget = min(int(0.35 * _vmem_capacity_bytes()), 80 * 2 ** 20)
    cap = max(128, ((m // 2) // 128) * 128) if m >= 256 else 128
    for tm in (2048, 1024, 512, 256, 128):
        if tm > cap:
            continue
        need = 2 * (tm * k * 2 + cout * tm * 2 + cout * 4 * 2) + cout * k * 2
        if need <= budget:
            return tm
    return 128


def _pick_affine_spatial_tile(hw, cout):
    """Spatial tile for the BN+ReLU kernel: must divide Ho*Wo and be a multiple of
    128 so both its loads and its channel-major stores are lane-dense/unmasked.
    Returns None if no such tile exists (caller falls back to XLA)."""
    budget = min(int(0.3 * _vmem_capacity_bytes()), 48 * 2 ** 20)
    t = (hw // 128) * 128
    while t >= 128:
        if hw % t == 0 and 2 * t * cout * (2 + 4) + 2 * cout * 4 <= budget:
            return t
        t -= 128
    return None


# ----------------------------------------------------------------------------
# Pallas kernels
# ----------------------------------------------------------------------------

def _conv_stats_kernel(a_ref, w_ref, y_ref, psum_ref, psq_ref, *, m_total, tm):
    """One M-tile of the 2x2/s2 conv as a channel-major NT matmul on the MXU:
        acc (Cout, TM) = weights (Cout, 4Cin) . patches-tile (TM, 4Cin)^T
    (the transpose lives in the dot_general dimension numbers; nothing is
    materialized).  The f32 accumulator is stored as bf16 (lane-dense: last dim is
    the M tile) and lane-reduced into per-channel partial sum / sum-of-squares for
    the fused BatchNorm.  No bias: it cancels under batch-statistics BN."""
    acc = jax.lax.dot_general(w_ref[...], a_ref[...], _NT_DIMS,
                              preferred_element_type=jnp.float32)
    y_ref[...] = acc.astype(y_ref.dtype)

    def emit_stats(v):
        psum_ref[...] = jnp.sum(v, axis=1, keepdims=True)       # (Cout, 1), XLU
        psq_ref[...] = jnp.sum(v * v, axis=1, keepdims=True)

    if m_total % tm == 0:
        emit_stats(acc)                       # every tile is full: no masking anywhere
    else:
        i = pl.program_id(0)
        last = pl.num_programs(0) - 1

        @pl.when(i != last)
        def _():
            emit_stats(acc)

        @pl.when(i == last)                   # only the ragged last tile masks OOB cols
        def _():
            col = i * tm + jax.lax.broadcasted_iota(jnp.int32, acc.shape, 1)
            emit_stats(jnp.where(col < m_total, acc, 0.0))


def _bn_relu_kernel(y_ref, scale_ref, shift_ref, o_ref):
    """Channel-major BN-apply + ReLU.  Reads the bf16 conv intermediate, upcasts to
    f32 in-register (v5e has no bf16 VALU), applies y*scale + shift and ReLU, and
    stores straight into the (N, Cout, Ho*Wo) output block (lane-dense stores)."""
    v = y_ref[...].astype(jnp.float32) * scale_ref[...] + shift_ref[...]
    o_ref[...] = jnp.maximum(v, 0.0)


# ----------------------------------------------------------------------------
# pallas_call wrappers
# ----------------------------------------------------------------------------

def _conv2x2s2_stats(patches, wmat_t):
    """patches: (M, K) bf16 space-to-depth rows; wmat_t: (Cout, K) bf16.
    Returns y_t (Cout, M) bf16 (conv without bias, channel-major) plus f32
    per-channel sum and sum-of-squares of the conv output over all M positions."""
    M, K = patches.shape
    Cout = wmat_t.shape[0]
    TM = _pick_conv_m_tile(M, K, Cout)
    G = pl.cdiv(M, TM)

    need = 2 * (TM * K * 2 + Cout * TM * 2 + Cout * 4 * 2) + Cout * K * 2
    y_t, psum, psq = pl.pallas_call(
        functools.partial(_conv_stats_kernel, m_total=M, tm=TM),
        out_shape=(
            jax.ShapeDtypeStruct((Cout, M), jnp.bfloat16),      # bf16 intermediate
            jax.ShapeDtypeStruct((G, Cout, 1), jnp.float32),
            jax.ShapeDtypeStruct((G, Cout, 1), jnp.float32),
        ),
        grid=(G,),
        in_specs=[
            pl.BlockSpec((TM, K), lambda i: (i, 0)),
            pl.BlockSpec((Cout, K), lambda i: (0, 0)),           # resident weights
        ],
        out_specs=(
            pl.BlockSpec((Cout, TM), lambda i: (0, i)),
            pl.BlockSpec((None, Cout, 1), lambda i: (i, 0, 0)),
            pl.BlockSpec((None, Cout, 1), lambda i: (i, 0, 0)),
        ),
        compiler_params=_mosaic_params(1, need),
    )(patches, wmat_t)
    return y_t, jnp.sum(psum, axis=(0, 2)), jnp.sum(psq, axis=(0, 2))


def _bn_relu_to_nchw(y_t, scale, shift, nb, hw):
    """y_t: (Cout, nb*hw) bf16, columns ordered (n, ho, wo).  Applies BN scale/shift
    + ReLU and writes directly into an (nb, Cout, hw) f32 buffer, so the NCHW result
    is a free reshape (no XLA output transpose).  Returns None when Ho*Wo has no
    128-multiple divisor (caller falls back)."""
    Cout = y_t.shape[0]
    Ts = _pick_affine_spatial_tile(hw, Cout)
    if Ts is None:
        return None
    S = hw // Ts
    scale2 = scale.reshape(Cout, 1).astype(jnp.float32)
    shift2 = shift.reshape(Cout, 1).astype(jnp.float32)

    need = 2 * (Cout * Ts * 2 + Cout * Ts * 4) + 2 * Cout * 4
    out3 = pl.pallas_call(
        _bn_relu_kernel,
        out_shape=jax.ShapeDtypeStruct((nb, Cout, hw), jnp.float32),
        grid=(nb, S),
        in_specs=[
            pl.BlockSpec((Cout, Ts), lambda n, s: (0, n * S + s)),
            pl.BlockSpec((Cout, 1), lambda n, s: (0, 0)),
            pl.BlockSpec((Cout, 1), lambda n, s: (0, 0)),
        ],
        out_specs=pl.BlockSpec((None, Cout, Ts), lambda n, s: (n, 0, s)),
        compiler_params=_mosaic_params(2, need),
    )(y_t, scale2, shift2)
    return out3


# ----------------------------------------------------------------------------
# DownsamplingLayer.forward
# ----------------------------------------------------------------------------

def downsampling_layer(x_nchw, w, b, gamma, beta, *, eps=1e-5):
    """ReLU(BatchNorm2d(Conv2d(k=2, s=2, p=0)(x))), training-mode BatchNorm (batch
    statistics, biased variance), as a default-constructed torch module computes it.

    x_nchw: (N, Cin, H, W); w: (Cout, Cin, 2, 2) torch layout; b/gamma/beta: (Cout,).
    The conv bias `b` is accepted for API parity but never used: under batch-stat
    BatchNorm it cancels exactly (the batch mean absorbs it), giving identical output.
    """
    del b
    Nb, Cin, H, W = x_nchw.shape
    Cout = w.shape[0]
    assert H % 2 == 0 and W % 2 == 0            # mirrors the reference shape assert
    Ho, Wo = H // 2, W // 2
    hw = Ho * Wo
    M = Nb * hw

    # Single XLA reorder pass: NCHW -> bf16 space-to-depth patches (M, 4*Cin), with
    # the bf16 cast fused into the copy.  No NHWC intermediate, no separate astype
    # copy, no padding copy (a ragged last M-tile is handled in-kernel).  Doing this
    # gather inside the kernel straight from NCHW would force 2-wide lane blocks
    # (last dim = kw), so the one reorder pass deliberately stays in XLA.
    p = x_nchw.astype(jnp.float32).reshape(Nb, Cin, Ho, 2, Wo, 2)
    p = jnp.transpose(p, (0, 2, 4, 3, 5, 1))                    # (n, ho, wo, kh, kw, c)
    patches = p.reshape(M, 4 * Cin).astype(jnp.bfloat16)
    # Weights, channel-major: (Cout, 4*Cin) with columns ordered (kh, kw, cin).
    wmat_t = jnp.transpose(w, (0, 2, 3, 1)).reshape(Cout, 4 * Cin).astype(jnp.bfloat16)
    # NOTE: K = 4*Cin and Cout stay whole blocks (they fit VMEM for typical channel
    # counts); extreme widths would want an extra K/N grid axis.

    y_t, sum_c, sumsq_c = _conv2x2s2_stats(patches, wmat_t)

    # O(Cout) BatchNorm folding in plain JAX (far too small to be worth a kernel).
    mean = sum_c / M
    var = jnp.maximum(sumsq_c / M - mean * mean, 0.0)           # biased (training-mode)
    inv_std = jax.lax.rsqrt(var + eps)
    scale = gamma.astype(jnp.float32) * inv_std
    shift = beta.astype(jnp.float32) - mean * scale

    out3 = _bn_relu_to_nchw(y_t, scale, shift, Nb, hw)
    if out3 is not None:
        return out3.reshape(Nb, Cout, Ho, Wo)                   # free reshape, no transpose

    # TODO(synk): Ho*Wo without a 128-multiple divisor (tiny/odd images) has no
    # lane-dense channel-major tiling; fall back to a plain-XLA epilogue there.
    v = jnp.maximum(y_t.astype(jnp.float32) * scale[:, None] + shift[:, None], 0.0)
    return jnp.transpose(v.reshape(Cout, Nb, Ho, Wo), (1, 0, 2, 3))


# ----------------------------------------------------------------------------
# Pure-JAX reference (for correctness check)
# ----------------------------------------------------------------------------

def _reference(x, w, b, gamma, beta, eps=1e-5):
    y = jax.lax.conv_general_dilated(
        x, w, window_strides=(2, 2), padding="VALID",
        dimension_numbers=("NCHW", "OIHW", "NCHW"))
    y = y + b[None, :, None, None]
    mean = jnp.mean(y, axis=(0, 2, 3), keepdims=True)
    var = jnp.var(y, axis=(0, 2, 3), keepdims=True)             # biased, training-mode BN
    yn = (y - mean) * jax.lax.rsqrt(var + eps)
    yn = yn * gamma[None, :, None, None] + beta[None, :, None, None]
    return jnp.maximum(yn, 0.0)


# ----------------------------------------------------------------------------
# Main
# ----------------------------------------------------------------------------

if __name__ == "__main__":
    batch, in_ch, out_ch = 2, 8, 32
    H = W = 32

    key = jax.random.PRNGKey(0)
    kx, kw, kb = jax.random.split(key, 3)
    x = jax.random.normal(kx, (batch, in_ch, H, W), jnp.float32)
    w = jax.random.normal(kw, (out_ch, in_ch, 2, 2), jnp.float32) / math.sqrt(4 * in_ch)
    b = 0.01 * jax.random.normal(kb, (out_ch,), jnp.float32)
    gamma = jnp.ones((out_ch,), jnp.float32)    # default BatchNorm2d affine init
    beta = jnp.zeros((out_ch,), jnp.float32)

    fwd = jax.jit(downsampling_layer)
    out = fwd(x, w, b, gamma, beta)
    jax.block_until_ready(out)

    assert out.shape == (batch, out_ch, H // 2, W // 2), out.shape
    assert out.dtype == jnp.float32
    assert bool(jnp.all(jnp.isfinite(out)))

    ref = _reference(x, w, b, gamma, beta)
    err = float(jnp.max(jnp.abs(out - ref)))
    assert err < 1e-1, f"max abs err vs reference: {err}"   # bf16 MXU operands / bf16 y
    print("KERNEL_OK")
</pallas_src>

<mosaic_0001>
module attributes {stable_mosaic.version = 11 : i64} {
  func.func @_conv_stats_kernel(%arg0: i32, %arg1: memref<256x32xbf16, #tpu.memory_space<vmem>>, %arg2: memref<32x32xbf16, #tpu.memory_space<vmem>>, %arg3: memref<32x256xbf16, #tpu.memory_space<vmem>>, %arg4: memref<1x32x1xf32, #tpu.memory_space<vmem>>, %arg5: memref<1x32x1xf32, #tpu.memory_space<vmem>>) attributes {dimension_semantics = [#tpu.dimension_semantics<parallel>], iteration_bounds = array<i64: 2>, scalar_prefetch = 0 : i64, scratch_operands = 0 : i64, tpu.core_type = #tpu.core_type<tc>, window_params = [{transform_indices = @transform_0, window_bounds = array<i64: 256, 32>}, {pipeline_mode = #tpu.pipeline_mode<synchronous>, transform_indices = @transform_1, window_bounds = array<i64: 32, 32>}, {transform_indices = @transform_2, window_bounds = array<i64: 32, 256>}, {transform_indices = @transform_3, window_bounds = array<i64: 1, 32, 1>}, {transform_indices = @transform_4, window_bounds = array<i64: 1, 32, 1>}]} {
    %c0 = arith.constant 0 : index
    %c0_0 = arith.constant 0 : index
    %0 = vector.load %arg2[%c0, %c0_0] : memref<32x32xbf16, #tpu.memory_space<vmem>>, vector<32x32xbf16>
    %c0_1 = arith.constant 0 : index
    %c0_2 = arith.constant 0 : index
    %1 = vector.load %arg1[%c0_1, %c0_2] : memref<256x32xbf16, #tpu.memory_space<vmem>>, vector<256x32xbf16>
    %cst = arith.constant dense<0.000000e+00> : vector<32x256xf32>
    %2 = tpu.matmul %0, %1, %cst {dimension_numbers = #tpu.dot_dimension_numbers<[1], [1], [0], [0], [0, 0, 1, 0], [], []>} : vector<32x32xbf16>, vector<256x32xbf16>, vector<32x256xf32> -> vector<32x256xf32>
    %3 = arith.truncf %2 : vector<32x256xf32> to vector<32x256xbf16>
    %c0_3 = arith.constant 0 : index
    %c0_4 = arith.constant 0 : index
    %4 = vector.load %arg3[%c0_3, %c0_4] : memref<32x256xbf16, #tpu.memory_space<vmem>>, vector<32x256xbf16>
    tpu.vector_store %arg3[%c0_3, %c0_4], %3 {strides = array<i32>} : memref<32x256xbf16, #tpu.memory_space<vmem>>, vector<32x256xbf16>,
    %cst_5 = arith.constant dense<0.000000e+00> : vector<32xf32>
    %5 = vector.multi_reduction <add>, %2, %cst_5 [1] : vector<32x256xf32> to vector<32xf32>
    %6 = vector.shape_cast %5 : vector<32xf32> to vector<32x1xf32>
    %c0_6 = arith.constant 0 : index
    %c0_7 = arith.constant 0 : index
    %c0_8 = arith.constant 0 : index
    %7 = vector.load %arg4[%c0_6, %c0_7, %c0_8] : memref<1x32x1xf32, #tpu.memory_space<vmem>>, vector<1x32x1xf32>
    %8 = vector.shape_cast %7 : vector<1x32x1xf32> to vector<32x1xf32>
    %9 = vector.shape_cast %6 : vector<32x1xf32> to vector<1x32x1xf32>
    tpu.vector_store %arg4[%c0_6, %c0_7, %c0_8], %9 {strides = array<i32>} : memref<1x32x1xf32, #tpu.memory_space<vmem>>, vector<1x32x1xf32>,
    %10 = arith.mulf %2, %2 : vector<32x256xf32>
    %cst_9 = arith.constant dense<0.000000e+00> : vector<32xf32>
    %11 = vector.multi_reduction <add>, %10, %cst_9 [1] : vector<32x256xf32> to vector<32xf32>
    %12 = vector.shape_cast %11 : vector<32xf32> to vector<32x1xf32>
    %c0_10 = arith.constant 0 : index
    %c0_11 = arith.constant 0 : index
    %c0_12 = arith.constant 0 : index
    %13 = vector.load %arg5[%c0_10, %c0_11, %c0_12] : memref<1x32x1xf32, #tpu.memory_space<vmem>>, vector<1x32x1xf32>
    %14 = vector.shape_cast %13 : vector<1x32x1xf32> to vector<32x1xf32>
    %15 = vector.shape_cast %12 : vector<32x1xf32> to vector<1x32x1xf32>
    tpu.vector_store %arg5[%c0_10, %c0_11, %c0_12], %15 {strides = array<i32>} : memref<1x32x1xf32, #tpu.memory_space<vmem>>, vector<1x32x1xf32>,
    return
  }
  func.func @transform_0(%arg0: i32) -> (i32, i32) {
    %c0_i32 = arith.constant 0 : i32
    %c0_i32_0 = arith.constant 0 : i32
    return %arg0, %c0_i32 : i32, i32
  }
  func.func @transform_1(%arg0: i32) -> (i32, i32) {
    %c0_i32 = arith.constant 0 : i32
    %c0_i32_0 = arith.constant 0 : i32
    %c0_i32_1 = arith.constant 0 : i32
    return %c0_i32, %c0_i32_0 : i32, i32
  }
  func.func @transform_2(%arg0: i32) -> (i32, i32) {
    %c0_i32 = arith.constant 0 : i32
    %c0_i32_0 = arith.constant 0 : i32
    return %c0_i32, %arg0 : i32, i32
  }
  func.func @transform_3(%arg0: i32) -> (i32, i32, i32) {
    %c0_i32 = arith.constant 0 : i32
    %c0_i32_0 = arith.constant 0 : i32
    %c0_i32_1 = arith.constant 0 : i32
    return %arg0, %c0_i32, %c0_i32_0 : i32, i32, i32
  }
  func.func @transform_4(%arg0: i32) -> (i32, i32, i32) {
    %c0_i32 = arith.constant 0 : i32
    %c0_i32_0 = arith.constant 0 : i32
    %c0_i32_1 = arith.constant 0 : i32
    return %arg0, %c0_i32, %c0_i32_0 : i32, i32, i32
  }
}

module attributes {stable_mosaic.version = 11 : i64} {
  func.func @_bn_relu_kernel(%arg0: i32, %arg1: i32, %arg2: memref<32x256xbf16, #tpu.memory_space<vmem>>, %arg3: memref<32x1xf32, #tpu.memory_space<vmem>>, %arg4: memref<32x1xf32, #tpu.memory_space<vmem>>, %arg5: memref<1x32x256xf32, #tpu.memory_space<vmem>>) attributes {dimension_semantics = [#tpu.dimension_semantics<parallel>, #tpu.dimension_semantics<parallel>], iteration_bounds = array<i64: 2, 1>, scalar_prefetch = 0 : i64, scratch_operands = 0 : i64, tpu.core_type = #tpu.core_type<tc>, window_params = [{transform_indices = @transform_0, window_bounds = array<i64: 32, 256>}, {pipeline_mode = #tpu.pipeline_mode<synchronous>, transform_indices = @transform_1, window_bounds = array<i64: 32, 1>}, {pipeline_mode = #tpu.pipeline_mode<synchronous>, transform_indices = @transform_2, window_bounds = array<i64: 32, 1>}, {transform_indices = @transform_3, window_bounds = array<i64: 1, 32, 256>}]} {
    %c0 = arith.constant 0 : index
    %c0_0 = arith.constant 0 : index
    %0 = vector.load %arg2[%c0, %c0_0] : memref<32x256xbf16, #tpu.memory_space<vmem>>, vector<32x256xbf16>
    %1 = arith.extf %0 : vector<32x256xbf16> to vector<32x256xf32>
    %c0_1 = arith.constant 0 : index
    %c0_2 = arith.constant 0 : index
    %2 = vector.load %arg3[%c0_1, %c0_2] : memref<32x1xf32, #tpu.memory_space<vmem>>, vector<32x1xf32>
    %3 = vector.broadcast %2 : vector<32x1xf32> to vector<32x256xf32>
    %4 = arith.mulf %1, %3 : vector<32x256xf32>
    %c0_3 = arith.constant 0 : index
    %c0_4 = arith.constant 0 : index
    %5 = vector.load %arg4[%c0_3, %c0_4] : memref<32x1xf32, #tpu.memory_space<vmem>>, vector<32x1xf32>
    %6 = vector.broadcast %5 : vector<32x1xf32> to vector<32x256xf32>
    %7 = arith.addf %4, %6 : vector<32x256xf32>
    %cst = arith.constant 0.000000e+00 : f32
    %8 = vector.broadcast %cst : f32 to vector<32x256xf32>
    %9 = arith.maximumf %7, %8 : vector<32x256xf32>
    %c0_5 = arith.constant 0 : index
    %c0_6 = arith.constant 0 : index
    %c0_7 = arith.constant 0 : index
    %10 = vector.load %arg5[%c0_5, %c0_6, %c0_7] : memref<1x32x256xf32, #tpu.memory_space<vmem>>, vector<1x32x256xf32>
    %11 = vector.shape_cast %10 : vector<1x32x256xf32> to vector<32x256xf32>
    %12 = vector.shape_cast %9 : vector<32x256xf32> to vector<1x32x256xf32>
    tpu.vector_store %arg5[%c0_5, %c0_6, %c0_7], %12 {strides = array<i32>} : memref<1x32x256xf32, #tpu.memory_space<vmem>>, vector<1x32x256xf32>,
    return
  }
  func.func @transform_0(%arg0: i32, %arg1: i32) -> (i32, i32) {
    %c1_i32 = arith.constant 1 : i32
    %0 = arith.muli %arg0, %c1_i32 : i32
    %1 = arith.addi %0, %arg1 : i32
    %c0_i32 = arith.constant 0 : i32
    %c0_i32_0 = arith.constant 0 : i32
    return %c0_i32, %1 : i32, i32
  }
  func.func @transform_1(%arg0: i32, %arg1: i32) -> (i32, i32) {
    %c0_i32 = arith.constant 0 : i32
    %c0_i32_0 = arith.constant 0 : i32
    %c0_i32_1 = arith.constant 0 : i32
    return %c0_i32, %c0_i32_0 : i32, i32
  }
  func.func @transform_2(%arg0: i32, %arg1: i32) -> (i32, i32) {
    %c0_i32 = arith.constant 0 : i32
    %c0_i32_0 = arith.constant 0 : i32
    %c0_i32_1 = arith.constant 0 : i32
    return %c0_i32, %c0_i32_0 : i32, i32
  }
  func.func @transform_3(%arg0: i32, %arg1: i32) -> (i32, i32, i32) {
    %c0_i32 = arith.constant 0 : i32
    %c0_i32_0 = arith.constant 0 : i32
    return %arg0, %c0_i32, %arg1 : i32, i32, i32
  }
}

</mosaic_0001>

<llo_original>
// kernel: downsampling_layer.2
$region0: #{downsampling_layer.2}
  #allocation0 [shape = 'u32[]', space=smem, size = 0x4, offset = 0x4, fixed_abs, tag = 'smem constant byte address 0x4 - core index']
  #allocation1 [shape = 'u32[144,128]{1,0:T(1,128)}', space=vmem, size = 0x12000, scoped, tag = 'internal scratch']
  %s0 = inlined_call_operand.vmem [shape: bf16[512,32], index: 0, kind: input, shape index: {}]
  %s1 = inlined_call_operand.vmem [shape: bf16[32,32], index: 1, kind: input, shape index: {}]
  %s2 = inlined_call_operand.vmem [shape: bf16[32,512], index: 2, kind: output, shape index: {0}]
  %s3 = inlined_call_operand.vmem [shape: f32[2,32,1], index: 3, kind: output, shape index: {1}]
  %s4 = inlined_call_operand.vmem [shape: f32[2,32,1], index: 4, kind: output, shape index: {2}]
  %5 = xla_tuple %s2, %s3, %s4
  %s6 = sld [smem:[#allocation0]]
  $region91: #{downsampling_layer.2} parent=0
    _
  %s8 = ssub.s32 1, %s6
  %s9 = scalar_select 0, %s8, %s6
  $region1: #{downsampling_layer.2} parent=0
    #allocation2 [shape = 'u8[32768]{0}', space=vmem, size = 0x8000, scoped, tag = 'output window, operand 0']
    loop: start=0, step=1, limit=4
    $region2: #{downsampling_layer.2} parent=1 // loop_pre_header
      _
    $region3: #{downsampling_layer.2} parent=1 // loop_header
      %s11 = sphi 0, %s15
      %p12 = scmp.ge.s32.totalorder %s11, 4
      %s21 = sphi 0, %s23
      %s24 = sphi 0, %s21
      %s25 = sphi 0, %s24
      %s41 = sphi 0, %s25
      %s45 = sphi 0, %s45
      %s47 = sphi 0, %s45
      %s48 = sphi 0, %s47
      %s62 = sphi 0, %s48
      %s68 = sphi 0, %s70
      %s71 = sphi 0, %s68
      %s72 = sphi 0, %s71
      %s88 = sphi 0, %s72
      %s94 = sphi 0, %s96
      %s97 = sphi 0, %s94
      %s98 = sphi 0, %s97
      %s114 = sphi 0, %s98
      %s120 = sphi 0, %s122
      %s123 = sphi 0, %s120
      %s124 = sphi 0, %s123
      %s140 = sphi 0, %s124
    $region4: #{downsampling_layer.2} parent=1 // loop_header_branch
      %14 = sbr.rel (%p12) target = $region8
    $region5: #{downsampling_layer.2} parent=1 // loop_body
      %s16 = ssub.s32 %s11, 1
      %s17 = ssub.s32 %s11, 2
      %s18 = sadd.s32 %s11, 1
      %s19 = ssub.s32 %s11, %s18
      %p20 = scmp.eq.s32.totalorder %s19, 0
      %s22 = sadd.s32 %s21, 1
      %s23 = scalar_select %p20, %s21, %s22
      %p26 = pneg %p20
      %p27 = scmp.eq.s32.totalorder %s11, 1
      %p28 = por %p26, %p27
      %p29 = scmp.ne.s32.totalorder %s21, %s24
      %p30 = scmp.eq.s32.totalorder %s11, 0
      %p31 = por %p29, %p30
      %p32 = scmp.ne.s32.totalorder %s21, %s24
      %p33 = scmp.eq.s32.totalorder %s16, 1
      %p34 = por %p32, %p33
      %p35 = scmp.ne.s32.totalorder %s24, %s25
      %p36 = scmp.eq.s32.totalorder %s16, 0
      %p37 = por %p35, %p36
      %p38 = scmp.ne.s32.totalorder %s24, %s25
      %p39 = scmp.eq.s32.totalorder %s17, 1
      %p40 = por %p38, %p39
      %p42 = scmp.ne.s32.totalorder %s25, %s41
      %p43 = scmp.eq.s32.totalorder %s17, 0
      %p44 = por %p42, %p43
      %s46 = sadd.s32 %s45, 1
      %p49 = scmp.eq.s32.totalorder %s11, 1
      %p50 = scmp.ne.s32.totalorder %s45, %s47
      %p51 = scmp.eq.s32.totalorder %s11, 0
      %p52 = por %p50, %p51
      %p53 = scmp.ne.s32.totalorder %s45, %s47
      %p54 = scmp.eq.s32.totalorder %s16, 1
      %p55 = por %p53, %p54
      %p56 = scmp.ne.s32.totalorder %s47, %s48
      %p57 = scmp.eq.s32.totalorder %s16, 0
      %p58 = por %p56, %p57
      %p59 = scmp.ne.s32.totalorder %s47, %s48
      %p60 = scmp.eq.s32.totalorder %s17, 1
      %p61 = por %p59, %p60
      %p63 = scmp.ne.s32.totalorder %s48, %s62
      %p64 = scmp.eq.s32.totalorder %s17, 0
      %p65 = por %p63, %p64
      %s66 = ssub.s32 %s11, %s18
      %p67 = scmp.eq.s32.totalorder %s66, 0
      %s69 = sadd.s32 %s68, 1
      %s70 = scalar_select %p67, %s68, %s69
      %p73 = pneg %p67
      %p74 = scmp.eq.s32.totalorder %s11, 1
      %p75 = por %p73, %p74
      %p76 = scmp.ne.s32.totalorder %s68, %s71
      %p77 = scmp.eq.s32.totalorder %s11, 0
      %p78 = por %p76, %p77
      %p79 = scmp.ne.s32.totalorder %s68, %s71
      %p80 = scmp.eq.s32.totalorder %s16, 1
      %p81 = por %p79, %p80
      %p82 = scmp.ne.s32.totalorder %s71, %s72
      %p83 = scmp.eq.s32.totalorder %s16, 0
      %p84 = por %p82, %p83
      %p85 = scmp.ne.s32.totalorder %s71, %s72
      %p86 = scmp.eq.s32.totalorder %s17, 1
      %p87 = por %p85, %p86
      %p89 = scmp.ne.s32.totalorder %s72, %s88
      %p90 = scmp.eq.s32.totalorder %s17, 0
      %p91 = por %p89, %p90
      %s92 = ssub.s32 %s11, %s18
      %p93 = scmp.eq.s32.totalorder %s92, 0
      %s95 = sadd.s32 %s94, 1
      %s96 = scalar_select %p93, %s94, %s95
      %p99 = pneg %p93
      %p100 = scmp.eq.s32.totalorder %s11, 1
      %p101 = por %p99, %p100
      %p102 = scmp.ne.s32.totalorder %s94, %s97
      %p103 = scmp.eq.s32.totalorder %s11, 0
      %p104 = por %p102, %p103
      %p105 = scmp.ne.s32.totalorder %s94, %s97
      %p106 = scmp.eq.s32.totalorder %s16, 1
      %p107 = por %p105, %p106
      %p108 = scmp.ne.s32.totalorder %s97, %s98
      %p109 = scmp.eq.s32.totalorder %s16, 0
      %p110 = por %p108, %p109
      %p111 = scmp.ne.s32.totalorder %s97, %s98
      %p112 = scmp.eq.s32.totalorder %s17, 1
      %p113 = por %p111, %p112
      %p115 = scmp.ne.s32.totalorder %s98, %s114
      %p116 = scmp.eq.s32.totalorder %s17, 0
      %p117 = por %p115, %p116
      %s118 = ssub.s32 %s11, %s18
      %p119 = scmp.eq.s32.totalorder %s118, 0
      %s121 = sadd.s32 %s120, 1
      %s122 = scalar_select %p119, %s120, %s121
      %p125 = pneg %p119
      %p126 = scmp.eq.s32.totalorder %s11, 1
      %p127 = por %p125, %p126
      %p128 = scmp.ne.s32.totalorder %s120, %s123
      %p129 = scmp.eq.s32.totalorder %s11, 0
      %p130 = por %p128, %p129
      %p131 = scmp.ne.s32.totalorder %s120, %s123
      %p132 = scmp.eq.s32.totalorder %s16, 1
      %p133 = por %p131, %p132
      %p134 = scmp.ne.s32.totalorder %s123, %s124
      %p135 = scmp.eq.s32.totalorder %s16, 0
      %p136 = por %p134, %p135
      %p137 = scmp.ne.s32.totalorder %s123, %s124
      %p138 = scmp.eq.s32.totalorder %s17, 1
      %p139 = por %p137, %p138
      %p141 = scmp.ne.s32.totalorder %s124, %s140
      %p142 = scmp.eq.s32.totalorder %s17, 0
      %p143 = por %p141, %p142
      %p144 = scmp.le.s32.totalorder 1, %s11
      %p145 = scmp.lt.s32.totalorder %s11, 3
      %p146 = pnand %p144, %p145
      %p147 = pneg %p146
      // Predicated region
      $region9: #{downsampling_layer.2} parent=5 // pred_check
        _
      $region10: #{downsampling_layer.2} parent=5 // pred_check_branch
        %149 = sbr.rel (%p146) target = $region12
      $region11: #{downsampling_layer.2} parent=5 // pred_region
        %s150 = ssub.s32 %s11, 1
        // Predicated region
        $region13: #{downsampling_layer.2} parent=11 // pred_check
          %p151 = pneg %p58
        $region14: #{downsampling_layer.2} parent=11 // pred_check_branch
          %153 = sbr.rel (%p151) target = $region16
        $region15: #{downsampling_layer.2} parent=11 // pred_region
          _
        $region16: #{downsampling_layer.2} parent=11 // pred_fallthru
          _
      $region12: #{downsampling_layer.2} parent=5 // pred_fallthru
        _
      %p154 = scmp.lt.s32.totalorder %s11, 2
      // Predicated region
      $region17: #{downsampling_layer.2} parent=5 // pred_check
        %p155 = pneg %p154
      $region18: #{downsampling_layer.2} parent=5 // pred_check_branch
        %157 = sbr.rel (%p155) target = $region20
      $region19: #{downsampling_layer.2} parent=5 // pred_region
        // Predicated region
        $region21: #{downsampling_layer.2} parent=19 // pred_check
          %p158 = pneg %p31
        $region22: #{downsampling_layer.2} parent=19 // pred_check_branch
          %160 = sbr.rel (%p158) target = $region24
        $region23: #{downsampling_layer.2} parent=19 // pred_region
          %s161 = smul.u32 32, %s11
          %p162 = scmp.lt.s32.totalorder %s161, 63
          %s163 = scalar_select %p162, %s161, 63
          %s164 = smul.addr %s163, 4
          %s165 = scalar_lea.vmem %s0, %s164
          %s166 = smul.u32 32, %s11
        $region24: #{downsampling_layer.2} parent=19 // pred_fallthru
          _
      $region20: #{downsampling_layer.2} parent=5 // pred_fallthru
        _
      %p167 = scmp.le.s32.totalorder 1, %s11
      %p168 = scmp.lt.s32.totalorder %s11, 3
      %p169 = pnand %p167, %p168
      %p170 = pneg %p169
      // Predicated region
      $region25: #{downsampling_layer.2} parent=5 // pred_check
        _
      $region26: #{downsampling_layer.2} parent=5 // pred_check_branch
        %172 = sbr.rel (%p169) target = $region28
      $region27: #{downsampling_layer.2} parent=5 // pred_region
        %s173 = ssub.s32 %s11, 1
        %s174 = smul.u32 32, %s16
        %p175 = scmp.lt.s32.totalorder %s174, 63
        %s176 = scalar_select %p175, %s174, 63
        %s177 = smul.addr %s176, 4
        %s178 = scalar_lea.vmem %s0, %s177
        %p179 = pneg %p37
        %p180 = pneg %p34
        %p181 = pneg %p58
        %p182 = pneg %p55
        %p183 = pneg %p84
        %p184 = pneg %p81
        %s185 = sand.u32 %s71, 1
        %s186 = sand.u32 %s71, 1
        %s187 = smul.addr %s186, 32
        %s188 = scalar_lea.vmem [#allocation2], %s187
        %p189 = pneg %p110
        %p190 = pneg %p107
        %p191 = scmp.lt.s32.totalorder %s16, 1
        %s192 = scalar_select %p191, %s16, 1
        %s193 = smul.addr %s192, 4
        %s194 = smul.addr %s193, 8
        %s195 = scalar_lea.vmem %s3, %s194
        %p196 = pneg %p136
        %p197 = pneg %p133
        %p198 = scmp.lt.s32.totalorder %s16, 1
        %s199 = scalar_select %p198, %s16, 1
        %s200 = smul.addr %s199, 4
        %s201 = smul.addr %s200, 8
        %s202 = scalar_lea.vmem %s4, %s201
        %s203 = smul.u32 32, %s16
        %p204 = scmp.lt.s32.totalorder %s203, 63
        %s205 = scalar_select %p204, %s203, 63
        %s206 = smul.addr %s205, 4
        %s207 = scalar_lea.vmem %s0, %s206
        %s208 = smul.u32 32, %s16
        %s209 = smul.u32 2, %s16
        %p210 = scmp.lt.s32.totalorder %s16, 1
        %s211 = scalar_select %p210, %s16, 1
        %s212 = smul.addr %s211, 4
        %s213 = smul.addr %s212, 8
        %s214 = scalar_lea.vmem %s3, %s213
        %p215 = scmp.lt.s32.totalorder %s16, 1
        %s216 = scalar_select %p215, %s16, 1
        %s217 = smul.addr %s216, 4
        %s218 = smul.addr %s217, 8
        %s219 = scalar_lea.vmem %s4, %s218
        %v221 = vld [vmem:[%s1] sm:$0xf]
        %v222 = vld [vmem:[%s1 + $0x4] sm:$0xf]
        %v223 = vld [vmem:[%s1 + $0x8] sm:$0xf]
        %v224 = vld [vmem:[%s1 + $0xc] sm:$0xf]
        %v225 = vld [vmem:[%s207] sm:$0xf]
        %v226 = vld [vmem:[%s207 + $0x4] sm:$0xf]
        %v227 = vld [vmem:[%s207 + $0x8] sm:$0xf]
        %v228 = vld [vmem:[%s207 + $0xc] sm:$0xf]
        %v229 = vld [vmem:[%s207 + $0x10] sm:$0xf]
        %v230 = vld [vmem:[%s207 + $0x14] sm:$0xf]
        %v231 = vld [vmem:[%s207 + $0x18] sm:$0xf]
        %v232 = vld [vmem:[%s207 + $0x1c] sm:$0xf]
        %v233 = vld [vmem:[%s207 + $0x20] sm:$0xf]
        %v234 = vld [vmem:[%s207 + $0x24] sm:$0xf]
        %v235 = vld [vmem:[%s207 + $0x28] sm:$0xf]
        %v236 = vld [vmem:[%s207 + $0x2c] sm:$0xf]
        %v237 = vld [vmem:[%s207 + $0x30] sm:$0xf]
        %v238 = vld [vmem:[%s207 + $0x34] sm:$0xf]
        %v239 = vld [vmem:[%s207 + $0x38] sm:$0xf]
        %v240 = vld [vmem:[%s207 + $0x3c] sm:$0xf]
        %v241 = vld [vmem:[%s207 + $0x40] sm:$0xf]
        %v242 = vld [vmem:[%s207 + $0x44] sm:$0xf]
        %v243 = vld [vmem:[%s207 + $0x48] sm:$0xf]
        %v244 = vld [vmem:[%s207 + $0x4c] sm:$0xf]
        %v245 = vld [vmem:[%s207 + $0x50] sm:$0xf]
        %v246 = vld [vmem:[%s207 + $0x54] sm:$0xf]
        %v247 = vld [vmem:[%s207 + $0x58] sm:$0xf]
        %v248 = vld [vmem:[%s207 + $0x5c] sm:$0xf]
        %v249 = vld [vmem:[%s207 + $0x60] sm:$0xf]
        %v250 = vld [vmem:[%s207 + $0x64] sm:$0xf]
        %v251 = vld [vmem:[%s207 + $0x68] sm:$0xf]
        %v252 = vld [vmem:[%s207 + $0x6c] sm:$0xf]
        %v253 = vld [vmem:[%s207 + $0x70] sm:$0xf]
        %v254 = vld [vmem:[%s207 + $0x74] sm:$0xf]
        %v255 = vld [vmem:[%s207 + $0x78] sm:$0xf]
        %v256 = vld [vmem:[%s207 + $0x7c] sm:$0xf]
        %v261 = vunpack.c.l.b16 %v221
        %v262 = vunpack.c.l.b16 %v222
        %v263 = vunpack.c.l.b16 %v223
        %v264 = vunpack.c.l.b16 %v224
        %v265 = vpack.c.b16 %v262, %v261
        %v266 = vpack.c.b16 %v264, %v263
        %v299 = vunpack.c.l.b16 %v225
        %v300 = vunpack.c.l.b16 %v226
        %v301 = vunpack.c.l.b16 %v227
        %v302 = vunpack.c.l.b16 %v228
        %v303 = vunpack.c.l.b16 %v229
        %v304 = vunpack.c.l.b16 %v230
        %v305 = vunpack.c.l.b16 %v231
        %v306 = vunpack.c.l.b16 %v232
        %v307 = vunpack.c.l.b16 %v233
        %v308 = vunpack.c.l.b16 %v234
        %v309 = vunpack.c.l.b16 %v235
        %v310 = vunpack.c.l.b16 %v236
        %v311 = vunpack.c.l.b16 %v237
        %v312 = vunpack.c.l.b16 %v238
        %v313 = vunpack.c.l.b16 %v239
        %v314 = vunpack.c.l.b16 %v240
        %v315 = vunpack.c.l.b16 %v241
        %v316 = vunpack.c.l.b16 %v242
        %v317 = vunpack.c.l.b16 %v243
        %v318 = vunpack.c.l.b16 %v244
        %v319 = vunpack.c.l.b16 %v245
        %v320 = vunpack.c.l.b16 %v246
        %v321 = vunpack.c.l.b16 %v247
        %v322 = vunpack.c.l.b16 %v248
        %v323 = vunpack.c.l.b16 %v249
        %v324 = vunpack.c.l.b16 %v250
        %v325 = vunpack.c.l.b16 %v251
        %v326 = vunpack.c.l.b16 %v252
        %v327 = vunpack.c.l.b16 %v253
        %v328 = vunpack.c.l.b16 %v254
        %v329 = vunpack.c.l.b16 %v255
        %v330 = vunpack.c.l.b16 %v256
        %v331 = vpack.c.b16 %v300, %v299
        %v332 = vpack.c.b16 %v302, %v301
        %v333 = vpack.c.b16 %v304, %v303
        %v334 = vpack.c.b16 %v306, %v305
        %v335 = vpack.c.b16 %v308, %v307
        %v336 = vpack.c.b16 %v310, %v309
        %v337 = vpack.c.b16 %v312, %v311
        %v338 = vpack.c.b16 %v314, %v313
        %v339 = vpack.c.b16 %v316, %v315
        %v340 = vpack.c.b16 %v318, %v317
        %v341 = vpack.c.b16 %v320, %v319
        %v342 = vpack.c.b16 %v322, %v321
        %v343 = vpack.c.b16 %v324, %v323
        %v344 = vpack.c.b16 %v326, %v325
        %v345 = vpack.c.b16 %v328, %v327
        %v346 = vpack.c.b16 %v330, %v329
        %vm347 = vcmask 261120
        %v349 = vsel %vm347, %v265, 0
        %v352 = vsel %vm347, %v266, 0
        %v355 = vsel %vm347, %v331, 0
        %v358 = vsel %vm347, %v332, 0
        %v361 = vsel %vm347, %v333, 0
        %v364 = vsel %vm347, %v334, 0
        %v367 = vsel %vm347, %v335, 0
        %v370 = vsel %vm347, %v336, 0
        %v373 = vsel %vm347, %v337, 0
        %v376 = vsel %vm347, %v338, 0
        %v379 = vsel %vm347, %v339, 0
        %v382 = vsel %vm347, %v340, 0
        %v385 = vsel %vm347, %v341, 0
        %v388 = vsel %vm347, %v342, 0
        %v391 = vsel %vm347, %v343, 0
        %v394 = vsel %vm347, %v344, 0
        %v397 = vsel %vm347, %v345, 0
        %v400 = vsel %vm347, %v346, 0
        %402 = vmatprep.subr.bf16.mxu0 0
        %403 = vmatpush1.bf16.xpose.msra.mxu0 %v355
        %404 = vmatprep.subr.bf16.mxu0 0
        %405 = vmatpush1.bf16.xpose.msra.mxu0 %v358
        %406 = vmatprep.subr.bf16.mxu0 0
        %407 = vmatpush1.bf16.xpose.msra.mxu0 %v361
        %408 = vmatprep.subr.bf16.mxu0 0
        %409 = vmatpush1.bf16.xpose.msra.mxu0 %v364
        %410 = vmatprep.subr.bf16.mxu0 0
        %411 = vmatpush1.bf16.xpose.msra.mxu0 %v367
        %412 = vmatprep.subr.bf16.mxu0 0
        %413 = vmatpush1.bf16.xpose.msra.mxu0 %v370
        %414 = vmatprep.subr.bf16.mxu0 0
        %415 = vmatpush1.bf16.xpose.msra.mxu0 %v373
        %416 = vmatprep.subr.bf16.mxu0 0
        %417 = vmatpush1.bf16.xpose.msra.mxu0 %v376
        %418 = vmatprep.subr.bf16.mxu0 0
        %419 = vmatpush1.bf16.xpose.msra.mxu0 %v379
        %420 = vmatprep.subr.bf16.mxu0 0
        %421 = vmatpush1.bf16.xpose.msra.mxu0 %v382
        %422 = vmatprep.subr.bf16.mxu0 0
        %423 = vmatpush1.bf16.xpose.msra.mxu0 %v385
        %424 = vmatprep.subr.bf16.mxu0 0
        %425 = vmatpush1.bf16.xpose.msra.mxu0 %v388
        %426 = vmatprep.subr.bf16.mxu0 0
        %427 = vmatpush1.bf16.xpose.msra.mxu0 %v391
        %428 = vmatprep.subr.bf16.mxu0 0
        %429 = vmatpush1.bf16.xpose.msra.mxu0 %v394
        %430 = vmatprep.subr.bf16.mxu0 0
        %431 = vmatpush1.bf16.xpose.msra.mxu0 %v397
        %432 = vmatprep.subr.bf16.mxu0 0
        %433 = vmatpush1.bf16.xpose.msra.mxu0 %v400
        %434 = vmatprep.mubr.bf16.mxu0 0
        %435 = vmatmul.mubr.bf16.gmra.mrb[0].mxu0 %v349
        %v436 = vpop.f32.mrb[0].mxu0
        %v437 = vadd.f32 0.0, %v436
        %v438 = vpop.f32.mrb[0].mxu0
        %v439 = vadd.f32 0.0, %v438
        %v440 = vpop.f32.mrb[0].mxu0
        %v441 = vadd.f32 0.0, %v440
        %v442 = vpop.f32.mrb[0].mxu0
        %v443 = vadd.f32 0.0, %v442
        %444 = vmatprep.mubr.bf16.mxu0 0
        %445 = vmatmul.mubr.bf16.gmra.mrb[0].mxu0 %v352
        %v446 = vpop.f32.mrb[0].mxu0
        %v447 = vadd.f32 0.0, %v446
        %v448 = vpop.f32.mrb[0].mxu0
        %v449 = vadd.f32 0.0, %v448
        %v450 = vpop.f32.mrb[0].mxu0
        %v451 = vadd.f32 0.0, %v450
        %v452 = vpop.f32.mrb[0].mxu0
        %v453 = vadd.f32 0.0, %v452
        %454 = vdwg.mxu0
        %v455 = vpack.c.bf16 %v441, %v437
        %v456 = vpack.c.bf16 %v443, %v439
        %v457 = vpack.c.bf16 %v451, %v447
        %v458 = vpack.c.bf16 %v453, %v449
        %v463 = vunpack.c.l.b16 %v455
        %v464 = vunpack.c.l.b16 %v456
        %v465 = vunpack.c.h.b16 %v455
        %v466 = vunpack.c.h.b16 %v456
        %v467 = vunpack.c.l.b16 %v457
        %v468 = vunpack.c.l.b16 %v458
        %v469 = vunpack.c.h.b16 %v457
        %v470 = vunpack.c.h.b16 %v458
        %v471 = vpack.c.b16 %v464, %v463
        %v472 = vpack.c.b16 %v466, %v465
        %v473 = vpack.c.b16 %v468, %v467
        %v474 = vpack.c.b16 %v470, %v469
        %479 = vst [vmem:[%s188] sm:$0xff] %v471
        %480 = vst [vmem:[%s188 + $0x8] sm:$0xff] %v472
        %481 = vst [vmem:[%s188 + $0x10] sm:$0xff] %v473
        %482 = vst [vmem:[%s188 + $0x18] sm:$0xff] %v474
        %v483 = vadd.f32 %v437, %v439
        %484 = vadd.xlane.f32.xlu0 %v483
        %v485 = vpop.xlane.xlu0 %484
        %v486 = vadd.f32 %v441, %v443
        %487 = vadd.xlane.f32.xlu0 %v486
        %v488 = vpop.xlane.xlu0 %487
        %v489 = vadd.f32 %v447, %v449
        %490 = vadd.xlane.f32.xlu0 %v489
        %v491 = vpop.xlane.xlu0 %490
        %v492 = vadd.f32 %v451, %v453
        %493 = vadd.xlane.f32.xlu0 %v492
        %v494 = vpop.xlane.xlu0 %493
        %vm495 = vcmask 7168
        %496 = vst.msk [vmem:[%s214] sm:$0xff] %vm495, %v485
        %497 = vst.msk [vmem:[%s214 + $0x8] sm:$0xff] %vm495, %v488
        %498 = vst.msk [vmem:[%s214 + $0x10] sm:$0xff] %vm495, %v491
        %499 = vst.msk [vmem:[%s214 + $0x18] sm:$0xff] %vm495, %v494
        %v500 = vmul.f32 %v437, %v437
        %v501 = vmul.f32 %v439, %v439
        %v502 = vmul.f32 %v441, %v441
        %v503 = vmul.f32 %v443, %v443
        %v504 = vmul.f32 %v447, %v447
        %v505 = vmul.f32 %v449, %v449
        %v506 = vmul.f32 %v451, %v451
        %v507 = vmul.f32 %v453, %v453
        %v508 = vadd.f32 %v500, %v501
        %509 = vadd.xlane.f32.xlu0 %v508
        %v510 = vpop.xlane.xlu0 %509
        %v511 = vadd.f32 %v502, %v503
        %512 = vadd.xlane.f32.xlu0 %v511
        %v513 = vpop.xlane.xlu0 %512
        %v514 = vadd.f32 %v504, %v505
        %515 = vadd.xlane.f32.xlu0 %v514
        %v516 = vpop.xlane.xlu0 %515
        %v517 = vadd.f32 %v506, %v507
        %518 = vadd.xlane.f32.xlu0 %v517
        %v519 = vpop.xlane.xlu0 %518
        %520 = vst.msk [vmem:[%s219] sm:$0xff] %vm495, %v510
        %521 = vst.msk [vmem:[%s219 + $0x8] sm:$0xff] %vm495, %v513
        %522 = vst.msk [vmem:[%s219 + $0x10] sm:$0xff] %vm495, %v516
        %523 = vst.msk [vmem:[%s219 + $0x18] sm:$0xff] %vm495, %v519
        %s524 = sand.u32 %s71, 1
        %s525 = sand.u32 %s71, 1
        %s526 = smul.addr %s525, 32
        %s527 = scalar_lea.vmem [#allocation2], %s526
        %p528 = scmp.lt.s32.totalorder %s16, 1
        %s529 = scalar_select %p528, %s16, 1
        %s530 = smul.addr %s529, 4
        %s531 = smul.addr %s530, 8
        %s532 = scalar_lea.vmem %s3, %s531
        %p533 = scmp.lt.s32.totalorder %s16, 1
        %s534 = scalar_select %p533, %s16, 1
        %s535 = smul.addr %s534, 4
        %s536 = smul.addr %s535, 8
        %s537 = scalar_lea.vmem %s4, %s536
        // Predicated region
        $region29: #{downsampling_layer.2} parent=27 // pred_check
          %p538 = pneg %p81
        $region30: #{downsampling_layer.2} parent=27 // pred_check_branch
          %540 = sbr.rel (%p538) target = $region32
        $region31: #{downsampling_layer.2} parent=27 // pred_region
          %s541 = smul.u32 2, %s16
          %s542 = smul.addr %s541, 4
          %s543 = scalar_lea.vmem %s2, %s542
          // Predicated region
          $region33: #{downsampling_layer.2} parent=31 // pred_check
            _
          $region34: #{downsampling_layer.2} parent=31 // pred_check_branch
            %545 = sbr.rel (0) target = $region36
          $region35: #{downsampling_layer.2} parent=31 // pred_region
            // Predicated region
            $region37: #{downsampling_layer.2} parent=35 // pred_check
              _
            $region38: #{downsampling_layer.2} parent=35 // pred_check_branch
              %547 = sbr.rel (0) target = $region40
            $region39: #{downsampling_layer.2} parent=35 // pred_region
              // Predicated region
              $region52: #{downsampling_layer.2} parent=39 // pred_check
                _
              $region53: #{downsampling_layer.2} parent=39 // pred_check_branch
                %568 = sbr.rel (0) target = $region55
              $region54: #{downsampling_layer.2} parent=39 // pred_region
                loop: start=0, step=1, limit=1
                $region56: #{downsampling_layer.2} parent=54 // loop_pre_header
                  _
                $region57: #{downsampling_layer.2} parent=54 // loop_header
                  %s570 = sphi 0, %s574
                  %p571 = scmp.ge.s32.totalorder %s570, 1
                  %s575 = sphi %s527, %s527
                  %s576 = sphi %s543, %s543
                $region58: #{downsampling_layer.2} parent=54 // loop_header_branch
                  %573 = sbr.rel (%p571) target = $region62
                $region59: #{downsampling_layer.2} parent=54 // loop_body
                  %v577 = vld [vmem:[%s575] sm:$0xff]
                  %578 = vst [vmem:[%s576] sm:$0xff] %v577
                  %v579 = vld [vmem:[%s575 + $0x8] sm:$0xff]
                  %580 = vst [vmem:[%s576 + $0x10] sm:$0xff] %v579
                  %v581 = vld [vmem:[%s575 + $0x10] sm:$0xff]
                  %582 = vst [vmem:[%s576 + $0x20] sm:$0xff] %v581
                  %v583 = vld [vmem:[%s575 + $0x18] sm:$0xff]
                  %584 = vst [vmem:[%s576 + $0x30] sm:$0xff] %v583
                $region60: #{downsampling_layer.2} parent=54 // loop_footer
                  %s574 = sadd.s32 1, %s570
                $region61: #{downsampling_layer.2} parent=54 // loop_footer_branch
                  %569 = sbr.rel target = $region57
                $region62: #{downsampling_layer.2} parent=54 // loop_exit
                  _
              $region55: #{downsampling_layer.2} parent=39 // pred_fallthru
                _
              // Predicated region
              $region63: #{downsampling_layer.2} parent=39 // pred_check
                _
              $region64: #{downsampling_layer.2} parent=39 // pred_check_branch
                %586 = sbr.rel target = $region66
              $region65: #{downsampling_layer.2} parent=39 // pred_region
                _
              $region66: #{downsampling_layer.2} parent=39 // pred_fallthru
                _
            $region40: #{downsampling_layer.2} parent=35 // pred_fallthru
              _
            // Predicated region
            $region41: #{downsampling_layer.2} parent=35 // pred_check
              _
            $region42: #{downsampling_layer.2} parent=35 // pred_check_branch
              %549 = sbr.rel target = $region44
            $region43: #{downsampling_layer.2} parent=35 // pred_region
              loop: start=0, step=1, limit=1
              $region45: #{downsampling_layer.2} parent=43 // loop_pre_header
                _
              $region46: #{downsampling_layer.2} parent=43 // loop_header
                %s552 = sphi 0, %s556
                %p553 = scmp.ge.s32.totalorder %s552, 1
                %s557 = sphi %s527, %s527
                %s558 = sphi %s543, %s543
              $region47: #{downsampling_layer.2} parent=43 // loop_header_branch
                %555 = sbr.rel (%p553) target = $region51
              $region48: #{downsampling_layer.2} parent=43 // loop_body
                %v559 = vld [vmem:[%s557] sm:$0xff]
                %560 = vst [vmem:[%s558] sm:$0xff] %v559
                %v561 = vld [vmem:[%s557 + $0x8] sm:$0xff]
                %562 = vst [vmem:[%s558 + $0x10] sm:$0xff] %v561
                %v563 = vld [vmem:[%s557 + $0x10] sm:$0xff]
                %564 = vst [vmem:[%s558 + $0x20] sm:$0xff] %v563
                %v565 = vld [vmem:[%s557 + $0x18] sm:$0xff]
                %566 = vst [vmem:[%s558 + $0x30] sm:$0xff] %v565
              $region49: #{downsampling_layer.2} parent=43 // loop_footer
                %s556 = sadd.s32 1, %s552
              $region50: #{downsampling_layer.2} parent=43 // loop_footer_branch
                %551 = sbr.rel target = $region46
              $region51: #{downsampling_layer.2} parent=43 // loop_exit
                _
            $region44: #{downsampling_layer.2} parent=35 // pred_fallthru
              _
          $region36: #{downsampling_layer.2} parent=31 // pred_fallthru
            _
          %587 = vnop
        $region32: #{downsampling_layer.2} parent=27 // pred_fallthru
          _
        // Predicated region
        $region67: #{downsampling_layer.2} parent=27 // pred_check
          %p588 = pneg %p107
        $region68: #{downsampling_layer.2} parent=27 // pred_check_branch
          %590 = sbr.rel (%p588) target = $region70
        $region69: #{downsampling_layer.2} parent=27 // pred_region
          _
        $region70: #{downsampling_layer.2} parent=27 // pred_fallthru
          _
        // Predicated region
        $region71: #{downsampling_layer.2} parent=27 // pred_check
          %p591 = pneg %p133
        $region72: #{downsampling_layer.2} parent=27 // pred_check_branch
          %593 = sbr.rel (%p591) target = $region74
        $region73: #{downsampling_layer.2} parent=27 // pred_region
          _
        $region74: #{downsampling_layer.2} parent=27 // pred_fallthru
          _
      $region28: #{downsampling_layer.2} parent=5 // pred_fallthru
        _
      %p594 = scmp.le.s32.totalorder 2, %s11
      // Predicated region
      $region75: #{downsampling_layer.2} parent=5 // pred_check
        %p595 = pneg %p594
      $region76: #{downsampling_layer.2} parent=5 // pred_check_branch
        %597 = sbr.rel (%p595) target = $region78
      $region77: #{downsampling_layer.2} parent=5 // pred_region
        %s598 = ssub.s32 %s11, 2
        // Predicated region
        $region79: #{downsampling_layer.2} parent=77 // pred_check
          %p599 = pneg %p87
        $region80: #{downsampling_layer.2} parent=77 // pred_check_branch
          %601 = sbr.rel (%p599) target = $region82
        $region81: #{downsampling_layer.2} parent=77 // pred_region
          %s602 = sand.u32 %s72, 1
          %s603 = sand.u32 %s72, 1
          %s604 = smul.addr %s603, 32
          %s605 = scalar_lea.vmem [#allocation2], %s604
        $region82: #{downsampling_layer.2} parent=77 // pred_fallthru
          _
        // Predicated region
        $region83: #{downsampling_layer.2} parent=77 // pred_check
          %p606 = pneg %p113
        $region84: #{downsampling_layer.2} parent=77 // pred_check_branch
          %608 = sbr.rel (%p606) target = $region86
        $region85: #{downsampling_layer.2} parent=77 // pred_region
          %p609 = scmp.lt.s32.totalorder %s17, 1
          %s610 = scalar_select %p609, %s17, 1
          %s611 = smul.addr %s610, 4
          %s612 = smul.addr %s611, 8
          %s613 = scalar_lea.vmem %s3, %s612
        $region86: #{downsampling_layer.2} parent=77 // pred_fallthru
          _
        // Predicated region
        $region87: #{downsampling_layer.2} parent=77 // pred_check
          %p614 = pneg %p139
        $region88: #{downsampling_layer.2} parent=77 // pred_check_branch
          %616 = sbr.rel (%p614) target = $region90
        $region89: #{downsampling_layer.2} parent=77 // pred_region
          %p617 = scmp.lt.s32.totalorder %s17, 1
          %s618 = scalar_select %p617, %s17, 1
          %s619 = smul.addr %s618, 4
          %s620 = smul.addr %s619, 8
          %s621 = scalar_lea.vmem %s4, %s620
        $region90: #{downsampling_layer.2} parent=77 // pred_fallthru
          _
      $region78: #{downsampling_layer.2} parent=5 // pred_fallthru
        _
    $region6: #{downsampling_layer.2} parent=1 // loop_footer
      %s15 = sadd.s32 1, %s11
    $region7: #{downsampling_layer.2} parent=1 // loop_footer_branch
      %10 = sbr.rel target = $region3
    $region8: #{downsampling_layer.2} parent=1 // loop_exit
      _

// kernel: downsampling_layer.3
$region0: #{downsampling_layer.3}
  #allocation0 [shape = 'u32[]', space=smem, size = 0x4, offset = 0x4, fixed_abs, tag = 'smem constant byte address 0x4 - core index']
  #allocation1 [shape = 'u32[144,128]{1,0:T(1,128)}', space=vmem, size = 0x12000, scoped, tag = 'internal scratch']
  %s0 = inlined_call_operand.vmem [shape: bf16[32,512], index: 0, kind: input, shape index: {}]
  %s1 = inlined_call_operand.vmem [shape: f32[32,1], index: 1, kind: input, shape index: {}]
  %s2 = inlined_call_operand.vmem [shape: f32[32,1], index: 2, kind: input, shape index: {}]
  %s3 = inlined_call_operand.vmem [shape: f32[2,32,256], index: 3, kind: output, shape index: {}]
  %s4 = sld [smem:[#allocation0]]
  $region83: #{downsampling_layer.3} parent=0
    _
  %s6 = ssub.s32 1, %s4
  %s7 = scalar_select 0, %s6, %s4
  $region1: #{downsampling_layer.3} parent=0
    #allocation2 [shape = 'u8[32768]{0}', space=vmem, size = 0x8000, scoped, tag = 'input window, operand 0']
    loop: start=0, step=1, limit=4
    $region2: #{downsampling_layer.3} parent=1 // loop_pre_header
      _
    $region3: #{downsampling_layer.3} parent=1 // loop_header
      %s9 = sphi 0, %s13
      %p10 = scmp.ge.s32.totalorder %s9, 4
      %s16 = sphi 0, %s28
      %s17 = sphi 0, %s24
      %s18 = sphi 0, %s16
      %s19 = sphi 0, %s17
      %s20 = sphi 0, %s18
      %s21 = sphi 0, %s19
      %s33 = sphi 0, %s35
      %s36 = sphi 0, %s33
      %s37 = sphi 0, %s36
      %s53 = sphi 0, %s37
      %s57 = sphi 0, %s57
      %s59 = sphi 0, %s57
      %s60 = sphi 0, %s59
      %s74 = sphi 0, %s60
      %s78 = sphi 0, %s78
      %s80 = sphi 0, %s78
      %s81 = sphi 0, %s80
      %s95 = sphi 0, %s81
      %s103 = sphi 0, %s105
      %s106 = sphi 0, %s103
      %s107 = sphi 0, %s106
      %s123 = sphi 0, %s107
    $region4: #{downsampling_layer.3} parent=1 // loop_header_branch
      %12 = sbr.rel (%p10) target = $region8
    $region5: #{downsampling_layer.3} parent=1 // loop_body
      %s14 = ssub.s32 %s9, 1
      %s15 = ssub.s32 %s9, 2
      %s22 = sadd.s32 1, %s17
      %p23 = scmp.ge.s32.totalorder %s22, 1
      %s24 = scalar_select %p23, 0, %s22
      %s25 = sadd.s32 1, %s16
      %s26 = scalar_select %p23, %s25, %s16
      %p27 = scmp.ge.s32.totalorder %s26, 2
      %s28 = scalar_select %p27, 0, %s26
      %s29 = sadd.s32 %s16, %s17
      %s30 = sadd.s32 %s28, %s24
      %s31 = ssub.s32 %s29, %s30
      %p32 = scmp.eq.s32.totalorder %s31, 0
      %s34 = sadd.s32 %s33, 1
      %s35 = scalar_select %p32, %s33, %s34
      %p38 = pneg %p32
      %p39 = scmp.eq.s32.totalorder %s9, 1
      %p40 = por %p38, %p39
      %p41 = scmp.ne.s32.totalorder %s33, %s36
      %p42 = scmp.eq.s32.totalorder %s9, 0
      %p43 = por %p41, %p42
      %p44 = scmp.ne.s32.totalorder %s33, %s36
      %p45 = scmp.eq.s32.totalorder %s14, 1
      %p46 = por %p44, %p45
      %p47 = scmp.ne.s32.totalorder %s36, %s37
      %p48 = scmp.eq.s32.totalorder %s14, 0
      %p49 = por %p47, %p48
      %p50 = scmp.ne.s32.totalorder %s36, %s37
      %p51 = scmp.eq.s32.totalorder %s15, 1
      %p52 = por %p50, %p51
      %p54 = scmp.ne.s32.totalorder %s37, %s53
      %p55 = scmp.eq.s32.totalorder %s15, 0
      %p56 = por %p54, %p55
      %s58 = sadd.s32 %s57, 1
      %p61 = scmp.eq.s32.totalorder %s9, 1
      %p62 = scmp.ne.s32.totalorder %s57, %s59
      %p63 = scmp.eq.s32.totalorder %s9, 0
      %p64 = por %p62, %p63
      %p65 = scmp.ne.s32.totalorder %s57, %s59
      %p66 = scmp.eq.s32.totalorder %s14, 1
      %p67 = por %p65, %p66
      %p68 = scmp.ne.s32.totalorder %s59, %s60
      %p69 = scmp.eq.s32.totalorder %s14, 0
      %p70 = por %p68, %p69
      %p71 = scmp.ne.s32.totalorder %s59, %s60
      %p72 = scmp.eq.s32.totalorder %s15, 1
      %p73 = por %p71, %p72
      %p75 = scmp.ne.s32.totalorder %s60, %s74
      %p76 = scmp.eq.s32.totalorder %s15, 0
      %p77 = por %p75, %p76
      %s79 = sadd.s32 %s78, 1
      %p82 = scmp.eq.s32.totalorder %s9, 1
      %p83 = scmp.ne.s32.totalorder %s78, %s80
      %p84 = scmp.eq.s32.totalorder %s9, 0
      %p85 = por %p83, %p84
      %p86 = scmp.ne.s32.totalorder %s78, %s80
      %p87 = scmp.eq.s32.totalorder %s14, 1
      %p88 = por %p86, %p87
      %p89 = scmp.ne.s32.totalorder %s80, %s81
      %p90 = scmp.eq.s32.totalorder %s14, 0
      %p91 = por %p89, %p90
      %p92 = scmp.ne.s32.totalorder %s80, %s81
      %p93 = scmp.eq.s32.totalorder %s15, 1
      %p94 = por %p92, %p93
      %p96 = scmp.ne.s32.totalorder %s81, %s95
      %p97 = scmp.eq.s32.totalorder %s15, 0
      %p98 = por %p96, %p97
      %s99 = ssub.s32 %s16, %s28
      %s100 = ssub.s32 %s17, %s24
      %s101 = sor.u32 %s99, %s100
      %p102 = scmp.eq.s32.totalorder %s101, 0
      %s104 = sadd.s32 %s103, 1
      %s105 = scalar_select %p102, %s103, %s104
      %p108 = pneg %p102
      %p109 = scmp.eq.s32.totalorder %s9, 1
      %p110 = por %p108, %p109
      %p111 = scmp.ne.s32.totalorder %s103, %s106
      %p112 = scmp.eq.s32.totalorder %s9, 0
      %p113 = por %p111, %p112
      %p114 = scmp.ne.s32.totalorder %s103, %s106
      %p115 = scmp.eq.s32.totalorder %s14, 1
      %p116 = por %p114, %p115
      %p117 = scmp.ne.s32.totalorder %s106, %s107
      %p118 = scmp.eq.s32.totalorder %s14, 0
      %p119 = por %p117, %p118
      %p120 = scmp.ne.s32.totalorder %s106, %s107
      %p121 = scmp.eq.s32.totalorder %s15, 1
      %p122 = por %p120, %p121
      %p124 = scmp.ne.s32.totalorder %s107, %s123
      %p125 = scmp.eq.s32.totalorder %s15, 0
      %p126 = por %p124, %p125
      %p127 = scmp.le.s32.totalorder 1, %s9
      %p128 = scmp.lt.s32.totalorder %s9, 3
      %p129 = pnand %p127, %p128
      %p130 = pneg %p129
      // Predicated region
      $region9: #{downsampling_layer.3} parent=5 // pred_check
        _
      $region10: #{downsampling_layer.3} parent=5 // pred_check_branch
        %132 = sbr.rel (%p129) target = $region12
      $region11: #{downsampling_layer.3} parent=5 // pred_region
        %s133 = ssub.s32 %s9, 1
        // Predicated region
        $region13: #{downsampling_layer.3} parent=11 // pred_check
          %p134 = pneg %p70
        $region14: #{downsampling_layer.3} parent=11 // pred_check_branch
          %136 = sbr.rel (%p134) target = $region16
        $region15: #{downsampling_layer.3} parent=11 // pred_region
          _
        $region16: #{downsampling_layer.3} parent=11 // pred_fallthru
          _
        // Predicated region
        $region17: #{downsampling_layer.3} parent=11 // pred_check
          %p137 = pneg %p91
        $region18: #{downsampling_layer.3} parent=11 // pred_check_branch
          %139 = sbr.rel (%p137) target = $region20
        $region19: #{downsampling_layer.3} parent=11 // pred_region
          _
        $region20: #{downsampling_layer.3} parent=11 // pred_fallthru
          _
      $region12: #{downsampling_layer.3} parent=5 // pred_fallthru
        _
      %p140 = scmp.lt.s32.totalorder %s9, 2
      // Predicated region
      $region21: #{downsampling_layer.3} parent=5 // pred_check
        %p141 = pneg %p140
      $region22: #{downsampling_layer.3} parent=5 // pred_check_branch
        %143 = sbr.rel (%p141) target = $region24
      $region23: #{downsampling_layer.3} parent=5 // pred_region
        // Predicated region
        $region25: #{downsampling_layer.3} parent=23 // pred_check
          %p144 = pneg %p43
        $region26: #{downsampling_layer.3} parent=23 // pred_check_branch
          %146 = sbr.rel (%p144) target = $region28
        $region27: #{downsampling_layer.3} parent=23 // pred_region
          %s147 = sand.u32 %s33, 1
          %s148 = sand.u32 %s33, 1
          %s149 = smul.addr %s148, 32
          %s150 = scalar_lea.vmem [#allocation2], %s149
          %s151 = sadd.s32 %s16, %s17
          %s152 = smul.u32 2, %s151
          %s153 = smul.addr %s152, 4
          %s154 = scalar_lea.vmem %s0, %s153
          // Predicated region
          $region29: #{downsampling_layer.3} parent=27 // pred_check
            _
          $region30: #{downsampling_layer.3} parent=27 // pred_check_branch
            %156 = sbr.rel (0) target = $region32
          $region31: #{downsampling_layer.3} parent=27 // pred_region
            // Predicated region
            $region33: #{downsampling_layer.3} parent=31 // pred_check
              _
            $region34: #{downsampling_layer.3} parent=31 // pred_check_branch
              %158 = sbr.rel (0) target = $region36
            $region35: #{downsampling_layer.3} parent=31 // pred_region
              // Predicated region
              $region48: #{downsampling_layer.3} parent=35 // pred_check
                _
              $region49: #{downsampling_layer.3} parent=35 // pred_check_branch
                %179 = sbr.rel (0) target = $region51
              $region50: #{downsampling_layer.3} parent=35 // pred_region
                loop: start=0, step=1, limit=1
                $region52: #{downsampling_layer.3} parent=50 // loop_pre_header
                  _
                $region53: #{downsampling_layer.3} parent=50 // loop_header
                  %s181 = sphi 0, %s185
                  %p182 = scmp.ge.s32.totalorder %s181, 1
                  %s186 = sphi %s154, %s154
                  %s187 = sphi %s150, %s150
                $region54: #{downsampling_layer.3} parent=50 // loop_header_branch
                  %184 = sbr.rel (%p182) target = $region58
                $region55: #{downsampling_layer.3} parent=50 // loop_body
                  %v188 = vld [vmem:[%s186] sm:$0xff]
                  %189 = vst [vmem:[%s187] sm:$0xff] %v188
                  %v190 = vld [vmem:[%s186 + $0x10] sm:$0xff]
                  %191 = vst [vmem:[%s187 + $0x8] sm:$0xff] %v190
                  %v192 = vld [vmem:[%s186 + $0x20] sm:$0xff]
                  %193 = vst [vmem:[%s187 + $0x10] sm:$0xff] %v192
                  %v194 = vld [vmem:[%s186 + $0x30] sm:$0xff]
                  %195 = vst [vmem:[%s187 + $0x18] sm:$0xff] %v194
                $region56: #{downsampling_layer.3} parent=50 // loop_footer
                  %s185 = sadd.s32 1, %s181
                $region57: #{downsampling_layer.3} parent=50 // loop_footer_branch
                  %180 = sbr.rel target = $region53
                $region58: #{downsampling_layer.3} parent=50 // loop_exit
                  _
              $region51: #{downsampling_layer.3} parent=35 // pred_fallthru
                _
              // Predicated region
              $region59: #{downsampling_layer.3} parent=35 // pred_check
                _
              $region60: #{downsampling_layer.3} parent=35 // pred_check_branch
                %197 = sbr.rel target = $region62
              $region61: #{downsampling_layer.3} parent=35 // pred_region
                _
              $region62: #{downsampling_layer.3} parent=35 // pred_fallthru
                _
            $region36: #{downsampling_layer.3} parent=31 // pred_fallthru
              _
            // Predicated region
            $region37: #{downsampling_layer.3} parent=31 // pred_check
              _
            $region38: #{downsampling_layer.3} parent=31 // pred_check_branch
              %160 = sbr.rel target = $region40
            $region39: #{downsampling_layer.3} parent=31 // pred_region
              loop: start=0, step=1, limit=1
              $region41: #{downsampling_layer.3} parent=39 // loop_pre_header
                _
              $region42: #{downsampling_layer.3} parent=39 // loop_header
                %s163 = sphi 0, %s167
                %p164 = scmp.ge.s32.totalorder %s163, 1
                %s168 = sphi %s154, %s154
                %s169 = sphi %s150, %s150
              $region43: #{downsampling_layer.3} parent=39 // loop_header_branch
                %166 = sbr.rel (%p164) target = $region47
              $region44: #{downsampling_layer.3} parent=39 // loop_body
                %v170 = vld [vmem:[%s168] sm:$0xff]
                %171 = vst [vmem:[%s169] sm:$0xff] %v170
                %v172 = vld [vmem:[%s168 + $0x10] sm:$0xff]
                %173 = vst [vmem:[%s169 + $0x8] sm:$0xff] %v172
                %v174 = vld [vmem:[%s168 + $0x20] sm:$0xff]
                %175 = vst [vmem:[%s169 + $0x10] sm:$0xff] %v174
                %v176 = vld [vmem:[%s168 + $0x30] sm:$0xff]
                %177 = vst [vmem:[%s169 + $0x18] sm:$0xff] %v176
              $region45: #{downsampling_layer.3} parent=39 // loop_footer
                %s167 = sadd.s32 1, %s163
              $region46: #{downsampling_layer.3} parent=39 // loop_footer_branch
                %162 = sbr.rel target = $region42
              $region47: #{downsampling_layer.3} parent=39 // loop_exit
                _
            $region40: #{downsampling_layer.3} parent=31 // pred_fallthru
              _
          $region32: #{downsampling_layer.3} parent=27 // pred_fallthru
            _
          %198 = vnop
        $region28: #{downsampling_layer.3} parent=23 // pred_fallthru
          _
      $region24: #{downsampling_layer.3} parent=5 // pred_fallthru
        _
      %p199 = scmp.le.s32.totalorder 1, %s9
      %p200 = scmp.lt.s32.totalorder %s9, 3
      %p201 = pnand %p199, %p200
      %p202 = pneg %p201
      // Predicated region
      $region63: #{downsampling_layer.3} parent=5 // pred_check
        _
      $region64: #{downsampling_layer.3} parent=5 // pred_check_branch
        %204 = sbr.rel (%p201) target = $region66
      $region65: #{downsampling_layer.3} parent=5 // pred_region
        %s205 = ssub.s32 %s9, 1
        %s206 = sand.u32 %s36, 1
        %s207 = sand.u32 %s36, 1
        %s208 = smul.addr %s207, 32
        %s209 = scalar_lea.vmem [#allocation2], %s208
        // Predicated region
        $region67: #{downsampling_layer.3} parent=65 // pred_check
          %p210 = pneg %p49
        $region68: #{downsampling_layer.3} parent=65 // pred_check_branch
          %212 = sbr.rel (%p210) target = $region70
        $region69: #{downsampling_layer.3} parent=65 // pred_region
          _
        $region70: #{downsampling_layer.3} parent=65 // pred_fallthru
          _
        %s213 = sand.u32 %s36, 1
        %s214 = sand.u32 %s36, 1
        %s215 = smul.addr %s214, 32
        %s216 = scalar_lea.vmem [#allocation2], %s215
        %p217 = pneg %p49
        %p218 = pneg %p46
        %p219 = pneg %p70
        %p220 = pneg %p67
        %p221 = pneg %p91
        %p222 = pneg %p88
        %p223 = pneg %p119
        %p224 = pneg %p116
        %s225 = smul.u32 2, %s19
        %p226 = scmp.lt.s32.totalorder %s18, 1
        %s227 = scalar_select %p226, %s18, 1
        %p228 = scmp.lt.s32.totalorder %s225, 1
        %s229 = scalar_select %p228, %s225, 1
        %s230 = smul.addr %s227, 8
        %s231 = sadd.s32 %s229, %s230
        %s232 = smul.addr %s231, 8
        %s233 = scalar_lea.vmem %s3, %s232
        %s234 = sadd.s32 %s18, %s19
        %s235 = smul.u32 2, %s234
        %s236 = smul.u32 2, %s19
        %p237 = scmp.lt.s32.totalorder %s18, 1
        %s238 = scalar_select %p237, %s18, 1
        %p239 = scmp.lt.s32.totalorder %s236, 1
        %s240 = scalar_select %p239, %s236, 1
        %s241 = smul.addr %s238, 8
        %s242 = sadd.s32 %s240, %s241
        %s243 = smul.addr %s242, 8
        %s244 = scalar_lea.vmem %s3, %s243
        %s245 = smul.u32 2, %s19
        %v246 = vld [vmem:[%s209] sm:$0xff]
        %v247 = vld [vmem:[%s209 + $0x8] sm:$0xff]
        %v248 = vld [vmem:[%s209 + $0x10] sm:$0xff]
        %v249 = vld [vmem:[%s209 + $0x18] sm:$0xff]
        %v250 = vunpack.c.l.bf16 %v246
        %v251 = vunpack.c.h.bf16 %v246
        %v252 = vunpack.c.l.bf16 %v247
        %v253 = vunpack.c.h.bf16 %v247
        %v254 = vunpack.c.l.bf16 %v248
        %v255 = vunpack.c.h.bf16 %v248
        %v256 = vunpack.c.l.bf16 %v249
        %v257 = vunpack.c.h.bf16 %v249
        %v258 = vld [vmem:[%s1] sm:$0xff]
        %v259 = vld [vmem:[%s1 + $0x8] sm:$0xff]
        %v260 = vld [vmem:[%s1 + $0x10] sm:$0xff]
        %v261 = vld [vmem:[%s1 + $0x18] sm:$0xff]
        %263 = vset.pattern.permute.xlu0 0
        %264 = vperm.xlu0 %263, %v258
        %v265 = vpop.permute.xlu0 %264
        %268 = vset.pattern.permute.xlu0 0
        %269 = vperm.xlu0 %268, %v259
        %v270 = vpop.permute.xlu0 %269
        %273 = vset.pattern.permute.xlu0 0
        %274 = vperm.xlu0 %273, %v260
        %v275 = vpop.permute.xlu0 %274
        %278 = vset.pattern.permute.xlu0 0
        %279 = vperm.xlu0 %278, %v261
        %v280 = vpop.permute.xlu0 %279
        %v282 = vmul.f32 %v250, %v265
        %v283 = vmul.f32 %v251, %v265
        %v284 = vmul.f32 %v252, %v270
        %v285 = vmul.f32 %v253, %v270
        %v286 = vmul.f32 %v254, %v275
        %v287 = vmul.f32 %v255, %v275
        %v288 = vmul.f32 %v256, %v280
        %v289 = vmul.f32 %v257, %v280
        %v290 = vld [vmem:[%s2] sm:$0xff]
        %v291 = vld [vmem:[%s2 + $0x8] sm:$0xff]
        %v292 = vld [vmem:[%s2 + $0x10] sm:$0xff]
        %v293 = vld [vmem:[%s2 + $0x18] sm:$0xff]
        %295 = vset.pattern.permute.xlu0 0
        %296 = vperm.xlu0 %295, %v290
        %v297 = vpop.permute.xlu0 %296
        %300 = vset.pattern.permute.xlu0 0
        %301 = vperm.xlu0 %300, %v291
        %v302 = vpop.permute.xlu0 %301
        %305 = vset.pattern.permute.xlu0 0
        %306 = vperm.xlu0 %305, %v292
        %v307 = vpop.permute.xlu0 %306
        %310 = vset.pattern.permute.xlu0 0
        %311 = vperm.xlu0 %310, %v293
        %v312 = vpop.permute.xlu0 %311
        %v314 = vadd.f32 %v282, %v297
        %v315 = vadd.f32 %v283, %v297
        %v316 = vadd.f32 %v284, %v302
        %v317 = vadd.f32 %v285, %v302
        %v318 = vadd.f32 %v286, %v307
        %v319 = vadd.f32 %v287, %v307
        %v320 = vadd.f32 %v288, %v312
        %v321 = vadd.f32 %v289, %v312
        %v322 = vmax.f32 %v314, 0.0
        %v323 = vmax.f32 %v315, 0.0
        %v324 = vmax.f32 %v316, 0.0
        %v325 = vmax.f32 %v317, 0.0
        %v326 = vmax.f32 %v318, 0.0
        %v327 = vmax.f32 %v319, 0.0
        %v328 = vmax.f32 %v320, 0.0
        %v329 = vmax.f32 %v321, 0.0
        %330 = vst [vmem:[%s244] sm:$0xff] %v322
        %331 = vst [vmem:[%s244 + $0x8] sm:$0xff] %v323
        %332 = vst [vmem:[%s244 + $0x10] sm:$0xff] %v324
        %333 = vst [vmem:[%s244 + $0x18] sm:$0xff] %v325
        %334 = vst [vmem:[%s244 + $0x20] sm:$0xff] %v326
        %335 = vst [vmem:[%s244 + $0x28] sm:$0xff] %v327
        %336 = vst [vmem:[%s244 + $0x30] sm:$0xff] %v328
        %337 = vst [vmem:[%s244 + $0x38] sm:$0xff] %v329
        %s338 = smul.u32 2, %s19
        %p339 = scmp.lt.s32.totalorder %s18, 1
        %s340 = scalar_select %p339, %s18, 1
        %p341 = scmp.lt.s32.totalorder %s338, 1
        %s342 = scalar_select %p341, %s338, 1
        %s343 = smul.addr %s340, 8
        %s344 = sadd.s32 %s342, %s343
        %s345 = smul.addr %s344, 8
        %s346 = scalar_lea.vmem %s3, %s345
        // Predicated region
        $region71: #{downsampling_layer.3} parent=65 // pred_check
          %p347 = pneg %p116
        $region72: #{downsampling_layer.3} parent=65 // pred_check_branch
          %349 = sbr.rel (%p347) target = $region74
        $region73: #{downsampling_layer.3} parent=65 // pred_region
          %s350 = smul.u32 2, %s19
        $region74: #{downsampling_layer.3} parent=65 // pred_fallthru
          _
      $region66: #{downsampling_layer.3} parent=5 // pred_fallthru
        _
      %p351 = scmp.le.s32.totalorder 2, %s9
      // Predicated region
      $region75: #{downsampling_layer.3} parent=5 // pred_check
        %p352 = pneg %p351
      $region76: #{downsampling_layer.3} parent=5 // pred_check_branch
        %354 = sbr.rel (%p352) target = $region78
      $region77: #{downsampling_layer.3} parent=5 // pred_region
        %s355 = ssub.s32 %s9, 2
        // Predicated region
        $region79: #{downsampling_layer.3} parent=77 // pred_check
          %p356 = pneg %p122
        $region80: #{downsampling_layer.3} parent=77 // pred_check_branch
          %358 = sbr.rel (%p356) target = $region82
        $region81: #{downsampling_layer.3} parent=77 // pred_region
          %s359 = smul.u32 2, %s21
          %p360 = scmp.lt.s32.totalorder %s20, 1
          %s361 = scalar_select %p360, %s20, 1
          %p362 = scmp.lt.s32.totalorder %s359, 1
          %s363 = scalar_select %p362, %s359, 1
          %s364 = smul.addr %s361, 8
          %s365 = sadd.s32 %s363, %s364
          %s366 = smul.addr %s365, 8
          %s367 = scalar_lea.vmem %s3, %s366
        $region82: #{downsampling_layer.3} parent=77 // pred_fallthru
          _
      $region78: #{downsampling_layer.3} parent=5 // pred_fallthru
        _
    $region6: #{downsampling_layer.3} parent=1 // loop_footer
      %s13 = sadd.s32 1, %s9
    $region7: #{downsampling_layer.3} parent=1 // loop_footer_branch
      %8 = sbr.rel target = $region3
    $region8: #{downsampling_layer.3} parent=1 // loop_exit
      _

</llo_original>
